<compile_context>
chip_gen: v7x
topology: tpu7x:2x2x1
jax: 0.10.0
libtpu: 0.0.40
codegen_flags: <defaults>
</compile_context>

<pallas_src>
from functools import partial

import jax
import jax.numpy as jnp
from jax.experimental import pallas as pl
from jax.experimental.pallas import tpu as pltpu


_LANES = 128


def _sublane_multiple(dtype) -> int:
    # f32 -> 8, bf16 -> 16, int8/fp8 -> 32 (packed-sublane alignment).
    itemsize = jnp.dtype(dtype).itemsize
    return max(8, 32 // max(itemsize, 1))


# ---------------------------------------------------------------------------
# Pallas kernel: grad_in = grad_out * (-alpha)   (single vmul per vreg, VPU)
# ---------------------------------------------------------------------------

def _neg_scale_kernel(g_ref, o_ref, *, neg_alpha):
    o_ref[...] = g_ref[...] * neg_alpha


def _run_neg_scale(g, alpha):
    orig_shape = g.shape
    orig_dtype = g.dtype
    n = g.size
    if n == 0:
        return g

    sub = _sublane_multiple(orig_dtype)
    tile_elems = sub * _LANES

    flat = g.reshape(-1)
    padded_n = ((n + tile_elems - 1) // tile_elems) * tile_elems
    needs_pad = padded_n != n
    if needs_pad:
        # Ragged tail: pad just enough to form whole (sub, 128) tiles.
        flat = jnp.pad(flat, (0, padded_n - n))
    rows = padded_n // _LANES
    slab = flat.reshape(rows, _LANES)

    # Block sizing: ~1 MiB per f32 block (2048 rows x 128 lanes x 4 B).
    # Double-buffered input + output = ~4 MiB, comfortably inside the
    # conservative scoped-VMEM defaults of v5e (16 MiB) and v7x (32 MiB),
    # while large enough to amortize the ~0.35 us per-grid-step overhead and
    # sit near the HBM roofline on v6e (tile >= 512 already reaches ~85%).
    tile_r = min(rows, 2048)
    tile_r = max(sub, (tile_r // sub) * sub)  # keep sublane alignment

    grid = (pl.cdiv(rows, tile_r),)

    itemsize = jnp.dtype(orig_dtype).itemsize
    cost = pl.CostEstimate(
        flops=n,
        transcendentals=0,
        bytes_accessed=2 * n * itemsize,
    )

    out = pl.pallas_call(
        partial(_neg_scale_kernel, neg_alpha=float(-alpha)),
        out_shape=jax.ShapeDtypeStruct(slab.shape, slab.dtype),
        grid=grid,
        in_specs=[pl.BlockSpec((tile_r, _LANES), lambda i: (i, 0))],
        out_specs=pl.BlockSpec((tile_r, _LANES), lambda i: (i, 0)),
        compiler_params=pltpu.CompilerParams(
            dimension_semantics=("parallel",),
        ),
        cost_estimate=cost,
    )(slab)

    if needs_pad:
        out = out.reshape(-1)[:n]
    return out.reshape(orig_shape)


# ---------------------------------------------------------------------------
# RevGradLayer: custom VJP (forward = identity, backward = -alpha * grad)
# ---------------------------------------------------------------------------

@partial(jax.custom_vjp, nondiff_argnums=(1,))
def rev_grad_layer(x, alpha=1.0):
    # Forward is a pure identity; no kernel, no copy.
    return x


def _rev_grad_fwd(x, alpha):
    return x, None


def _rev_grad_bwd(alpha, _res, g):
    return (_run_neg_scale(g, alpha),)


rev_grad_layer.defvjp(_rev_grad_fwd, _rev_grad_bwd)


# ---------------------------------------------------------------------------
# Demo / check
# ---------------------------------------------------------------------------

if __name__ == "__main__":
    key = jax.random.PRNGKey(0)
    # NCHW, small shapes: batch=2, channels=4, spatial=16x16
    x = jax.random.normal(key, (2, 4, 16, 16), dtype=jnp.float32)
    alpha = 1.0

    # Forward: must be exact identity.
    y = rev_grad_layer(x, alpha)
    y = jax.block_until_ready(y)
    assert y.shape == x.shape and y.dtype == x.dtype
    assert bool(jnp.all(y == x))

    # Backward: gradient of sum(y) wrt x must be -alpha everywhere.
    gx = jax.grad(lambda a: jnp.sum(rev_grad_layer(a, alpha)))(x)
    gx = jax.block_until_ready(gx)
    assert bool(jnp.allclose(gx, -alpha * jnp.ones_like(x)))

    # Same checks under jit with a non-unit alpha and a non-trivial loss.
    alpha2 = 0.5
    loss = jax.jit(lambda a: jnp.sum(rev_grad_layer(a, alpha2) * a))
    gx2 = jax.block_until_ready(jax.grad(loss)(x))
    assert bool(jnp.allclose(gx2, (1.0 - alpha2) * x, atol=1e-6))

    # Ragged-size check (padding path): 1-D vector not a multiple of 8*128.
    v = jax.random.normal(jax.random.PRNGKey(1), (1000,), dtype=jnp.float32)
    gv = jax.block_until_ready(
        jax.grad(lambda a: jnp.sum(rev_grad_layer(a, alpha2)))(v))
    assert gv.shape == v.shape
    assert bool(jnp.allclose(gv, -alpha2 * jnp.ones_like(v)))

    print("KERNEL_OK")
</pallas_src>

<mosaic_0001>
module attributes {stable_mosaic.version = 11 : i64} {
  func.func @_neg_scale_kernel(%arg0: i32, %arg1: memref<16x128xf32, #tpu.memory_space<vmem>>, %arg2: memref<16x128xf32, #tpu.memory_space<vmem>>) attributes {dimension_semantics = [#tpu.dimension_semantics<parallel>], iteration_bounds = array<i64: 1>, scalar_prefetch = 0 : i64, scratch_operands = 0 : i64, tpu.core_type = #tpu.core_type<tc>, window_params = [{transform_indices = @transform_0, window_bounds = array<i64: 16, 128>}, {transform_indices = @transform_1, window_bounds = array<i64: 16, 128>}]} {
    %c0 = arith.constant 0 : index
    %c0_0 = arith.constant 0 : index
    %0 = vector.load %arg1[%c0, %c0_0] : memref<16x128xf32, #tpu.memory_space<vmem>>, vector<16x128xf32>
    %cst = arith.constant -1.000000e+00 : f32
    %1 = vector.broadcast %cst : f32 to vector<16x128xf32>
    %2 = arith.mulf %0, %1 : vector<16x128xf32>
    %c0_1 = arith.constant 0 : index
    %c0_2 = arith.constant 0 : index
    %3 = vector.load %arg2[%c0_1, %c0_2] : memref<16x128xf32, #tpu.memory_space<vmem>>, vector<16x128xf32>
    tpu.vector_store %arg2[%c0_1, %c0_2], %2 {strides = array<i32>} : memref<16x128xf32, #tpu.memory_space<vmem>>, vector<16x128xf32>,
    return
  }
  func.func @transform_0(%arg0: i32) -> (i32, i32) {
    %c0_i32 = arith.constant 0 : i32
    %c0_i32_0 = arith.constant 0 : i32
    return %arg0, %c0_i32 : i32, i32
  }
  func.func @transform_1(%arg0: i32) -> (i32, i32) {
    %c0_i32 = arith.constant 0 : i32
    %c0_i32_0 = arith.constant 0 : i32
    return %arg0, %c0_i32 : i32, i32
  }
}

</mosaic_0001>

<llo_original>
// kernel: tpu_custom_call.1
$region0: #{tpu_custom_call.1}
  #allocation0 [shape = 'u32[]', space=smem, size = 0x4, offset = 0x4, fixed_abs, tag = 'smem constant byte address 0x4 - core index']
  #allocation1 [shape = 'u32[144,128]{1,0:T(1,128)}', space=vmem, size = 0x12000, scoped, tag = 'internal scratch']
  %s0 = inlined_call_operand.hbm [shape: f32[16,128], index: 0, kind: input, shape index: {}]
  %s1 = inlined_call_operand.hbm [shape: f32[16,128], index: 1, kind: output, shape index: {}]
  %s2 = sld [smem:[#allocation0]]
  $region18: #{tpu_custom_call.1} parent=0
    _
  %s4 = ssub.s32 1, %s2
  %s5 = scalar_select 0, %s4, %s2
  $region1: #{tpu_custom_call.1} parent=0
    #allocation2 [shape = 'u8[8192]{0}', space=vmem, size = 0x2000, scoped, tag = 'input window, operand 0, single buffered']
    #allocation3 [shape = 's32[1]{0}', space=sflag, size = 0x4, scoped, tag = 'scoped memory for tpu_custom_call.1']
    #allocation4 [shape = 's32[1]{0}', space=sflag, size = 0x4, scoped, tag = 'scoped memory for tpu_custom_call.1']
    #allocation5 [shape = 'u8[8192]{0}', space=vmem, size = 0x2000, scoped, tag = 'output window, operand 0, single buffered']
    %6 = vsyncpa [#allocation3], 0
    %7 = vsyncpa [#allocation4], 0
    // Predicated region
    $region2: #{tpu_custom_call.1} parent=1 // pred_check
      _
    $region3: #{tpu_custom_call.1} parent=1 // pred_check_branch
      %9 = sbr.rel (0) target = $region5
    $region4: #{tpu_custom_call.1} parent=1 // pred_region
      %s11 = ssub.s32 256, 256
      %12 = vsyncadd [#allocation3], %s11
      %s13 = sshll.u32 [#allocation2], 4
      %s14 = int_to_ptr.vmem [resolvable:$true] %s13
      %19 = dma.hbm_to_vmem [thread:$0]  %s0, 256, %s14, [#allocation3], 128, 128, 8
    $region5: #{tpu_custom_call.1} parent=1 // pred_fallthru
      _
    // Predicated region
    $region6: #{tpu_custom_call.1} parent=1 // pred_check
      _
    $region7: #{tpu_custom_call.1} parent=1 // pred_check_branch
      %21 = sbr.rel (0) target = $region9
    $region8: #{tpu_custom_call.1} parent=1 // pred_region
      %22 = dma.done [#allocation3], 256
    $region9: #{tpu_custom_call.1} parent=1 // pred_fallthru
      _
    %v23 = vld [vmem:[#allocation2] sm:$0xff]
    %v24 = vld [vmem:[#allocation2 + $0x8] sm:$0xff]
    %v25 = vmul.f32 %v23, -1.0
    %v26 = vmul.f32 %v24, -1.0
    %27 = vst [vmem:[#allocation5] sm:$0xff] %v25
    %28 = vst [vmem:[#allocation5 + $0x8] sm:$0xff] %v26
    // Predicated region
    $region10: #{tpu_custom_call.1} parent=1 // pred_check
      _
    $region11: #{tpu_custom_call.1} parent=1 // pred_check_branch
      %30 = sbr.rel (0) target = $region13
    $region12: #{tpu_custom_call.1} parent=1 // pred_region
      %s32 = ssub.s32 256, 256
      %33 = vsyncadd [#allocation4], %s32
      %s34 = sshll.u32 [#allocation5], 4
      %s35 = int_to_ptr.vmem [resolvable:$true] %s34
      %40 = dma.vmem_to_hbm [thread:$0]  %s35, 256, %s1, [#allocation4], 128, 128, 8
    $region13: #{tpu_custom_call.1} parent=1 // pred_fallthru
      _
    // Predicated region
    $region14: #{tpu_custom_call.1} parent=1 // pred_check
      _
    $region15: #{tpu_custom_call.1} parent=1 // pred_check_branch
      %42 = sbr.rel (0) target = $region17
    $region16: #{tpu_custom_call.1} parent=1 // pred_region
      %43 = dma.done [#allocation4], 256
    $region17: #{tpu_custom_call.1} parent=1 // pred_fallthru
      _
    %44 = vsyncpa [#allocation3], 1
    %45 = vsyncpa [#allocation4], 1

</llo_original>
